<compile_context>
chip_gen: v6e
topology: v6e:2x2x1
jax: 0.10.0
libtpu: 0.0.40
codegen_flags: <defaults>
</compile_context>

<pallas_src>
import jax
import jax.numpy as jnp
from jax.experimental import pallas as pl
from jax.experimental.pallas import tpu as pltpu

EPS = 1e-5


# ------------------------------ kernels ------------------------------------


def _layer1_kernel(x_ref, w1_ref, g1_ref, be1_ref, h_ref):
    # Linear (bias-free: bias cancels in batch-stat BN), bf16 operands on the
    # MXU with f32 accumulation.
    h = jnp.dot(x_ref[...], w1_ref[...], preferred_element_type=jnp.float32)

    # BatchNorm1d, train mode (biased batch variance), affine folded into a
    # single per-column scale; then ReLU.  Whole batch is resident per feature
    # tile, so the centered two-pass variance is exact.
    mu = jnp.mean(h, axis=0, keepdims=True)                  # (1, tile_h) f32
    d = h - mu
    var = jnp.mean(d * d, axis=0, keepdims=True)             # biased variance
    scale = g1_ref[...] * jax.lax.rsqrt(var + EPS)           # (1, tile_h)
    # Store bf16: halves h HBM traffic and layer3's resident VMEM.
    h_ref[...] = jnp.maximum(d * scale + be1_ref[...], 0.0).astype(h_ref.dtype)


def _layer3_kernel(h_ref, w2_ref, o_ref):
    # Linear (bias-free); h is already bf16, f32 accumulation on the MXU.
    y = jnp.dot(h_ref[...], w2_ref[...], preferred_element_type=jnp.float32)

    # BatchNorm1d(affine=False), batch statistics.
    mu = jnp.mean(y, axis=0, keepdims=True)
    d = y - mu
    var = jnp.mean(d * d, axis=0, keepdims=True)
    o_ref[...] = d * jax.lax.rsqrt(var + EPS)


# ------------------------------ wrapper -------------------------------------


def _pick_tile(n):
    """Feature-tile width for a 1-D 'parallel' grid over n features.

    Requires 128-lane alignment.  Prefers the largest tile in {512, 256, 128}
    that yields an even number of grid steps (>= 4 when 512 allows it) so the
    two v7x TensorCores get balanced waves; never silently falls back to a
    non-aligned full dimension."""
    assert n % 128 == 0, (
        f"feature dim {n} must be a multiple of 128 (TPU lane width)")
    if n % 512 == 0 and (n // 512) >= 4 and (n // 512) % 2 == 0:
        return 512
    for t in (512, 256, 128):
        if n % t == 0 and (n // t) >= 2 and (n // t) % 2 == 0:
            return t
    for t in (512, 256, 128):
        if n % t == 0 and (n // t) >= 2:
            return t
    return n  # small dims (e.g. 128): single full-width tile


def _vmem_limit(bytes_needed):
    """Scoped-VMEM limit: actual per-step working set + 25% headroom for
    compiler temporaries, floored at the 32 MiB default (v6e/v7x) and capped
    below v7x's 64 MiB physical VMEM per TensorCore."""
    return int(min(max(bytes_needed * 5 // 4, 32 * 1024 * 1024),
                   60 * 1024 * 1024))


def projection_layer_forward(x, w1, g1, be1, w2, *, tile_h=None, tile_o=None):
    """x: (B, input_d) f32; w1: (input_d, hidden_d); w2: (hidden_d, output_d);
    g1/be1: (1, hidden_d) BatchNorm affine params. Returns (B, output_d) f32.

    Linear biases are NOT taken: they cancel in train-mode BatchNorm.
    Note: tuning was done assuming a realistic per-device batch (B >= ~256);
    tiny B under-feeds the MXU M dimension and flips the regime."""
    B, input_d = x.shape
    hidden_d = w1.shape[1]
    output_d = w2.shape[1]
    tile_h = tile_h or _pick_tile(hidden_d)
    tile_o = tile_o or _pick_tile(output_d)

    # bf16 matmul operands (halves weight/activation DMA bytes, hits the bf16
    # MXU rate); BN params and statistics stay f32.
    x_bf = x.astype(jnp.bfloat16)
    w1_bf = w1.astype(jnp.bfloat16)
    w2_bf = w2.astype(jnp.bfloat16)

    # ---- layer1 (+ReLU): grid over hidden-feature tiles ----
    # Per-step VMEM: x bf16 (single-buffered) + 2x w1 tile (bf16)
    #              + 2x h out tile (bf16) + f32 compute temp (B, tile_h).
    l1_bytes = (B * input_d * 2
                + 2 * input_d * tile_h * 2
                + 2 * B * tile_h * 2
                + B * tile_h * 4)
    l1_params = pltpu.CompilerParams(
        dimension_semantics=("parallel",),
        vmem_limit_bytes=_vmem_limit(l1_bytes))
    l1_cost = pl.CostEstimate(
        flops=2 * B * input_d * hidden_d + 6 * B * hidden_d,
        transcendentals=hidden_d,
        bytes_accessed=(B * input_d * 2 + input_d * hidden_d * 2
                        + 2 * hidden_d * 4 + B * hidden_d * 2))

    h = pl.pallas_call(
        _layer1_kernel,
        out_shape=jax.ShapeDtypeStruct((B, hidden_d), jnp.bfloat16),
        grid=(hidden_d // tile_h,),
        in_specs=[
            # x is grid-invariant -> single buffer.
            pl.BlockSpec((B, input_d), lambda j: (0, 0),
                         pipeline_mode=pl.Buffered(1)),
            pl.BlockSpec((input_d, tile_h), lambda j: (0, j)),
            pl.BlockSpec((1, tile_h), lambda j: (0, j)),
            pl.BlockSpec((1, tile_h), lambda j: (0, j)),
        ],
        out_specs=pl.BlockSpec((B, tile_h), lambda j: (0, j)),
        compiler_params=l1_params,
        cost_estimate=l1_cost,
    )(x_bf, w1_bf, g1, be1)

    # ---- layer2: Identity ----

    # ---- layer3: grid over output-feature tiles ----
    # Per-step VMEM: h bf16 (single-buffered) + 2x w2 tile (bf16)
    #              + 2x out tile (f32) + f32 compute temp (B, tile_o).
    l3_bytes = (B * hidden_d * 2
                + 2 * hidden_d * tile_o * 2
                + 2 * B * tile_o * 4
                + B * tile_o * 4)
    l3_params = pltpu.CompilerParams(
        dimension_semantics=("parallel",),
        vmem_limit_bytes=_vmem_limit(l3_bytes))
    l3_cost = pl.CostEstimate(
        flops=2 * B * hidden_d * output_d + 5 * B * output_d,
        transcendentals=output_d,
        bytes_accessed=(B * hidden_d * 2 + hidden_d * output_d * 2
                        + B * output_d * 4))

    out = pl.pallas_call(
        _layer3_kernel,
        out_shape=jax.ShapeDtypeStruct((B, output_d), jnp.float32),
        grid=(output_d // tile_o,),
        in_specs=[
            # h is grid-invariant -> single buffer.
            pl.BlockSpec((B, hidden_d), lambda j: (0, 0),
                         pipeline_mode=pl.Buffered(1)),
            pl.BlockSpec((hidden_d, tile_o), lambda j: (0, j)),
        ],
        out_specs=pl.BlockSpec((B, tile_o), lambda j: (0, j)),
        compiler_params=l3_params,
        cost_estimate=l3_cost,
    )(h, w2_bf)
    return out


# ------------------------------ references ----------------------------------


def _reference_f32(x, w1, b1, g1, be1, w2, b2):
    """Pure-f32 PyTorch semantics (with Linear biases)."""
    h = x @ w1 + b1
    mu = h.mean(0, keepdims=True)
    var = ((h - mu) ** 2).mean(0, keepdims=True)
    h = (h - mu) / jnp.sqrt(var + EPS) * g1 + be1
    h = jnp.maximum(h, 0.0)
    y = h @ w2 + b2
    mu2 = y.mean(0, keepdims=True)
    var2 = ((y - mu2) ** 2).mean(0, keepdims=True)
    return (y - mu2) / jnp.sqrt(var2 + EPS)


def _reference_bf16_mirror(x, w1, g1, be1, w2):
    """Exact mirror of the kernel's numerics: bf16 matmul operands, f32
    accumulation / statistics, bias-free, bf16 intermediate h."""
    h = jnp.dot(x.astype(jnp.bfloat16), w1.astype(jnp.bfloat16),
                preferred_element_type=jnp.float32)
    mu = h.mean(0, keepdims=True)
    d = h - mu
    var = (d * d).mean(0, keepdims=True)
    h = jnp.maximum(d * (g1 * jax.lax.rsqrt(var + EPS)) + be1,
                    0.0).astype(jnp.bfloat16)
    y = jnp.dot(h, w2.astype(jnp.bfloat16),
                preferred_element_type=jnp.float32)
    mu2 = y.mean(0, keepdims=True)
    d2 = y - mu2
    var2 = (d2 * d2).mean(0, keepdims=True)
    return d2 * jax.lax.rsqrt(var2 + EPS)


# ------------------------------ smoke test ----------------------------------


if __name__ == "__main__":
    # Small shapes consistent with projection_layer(input_d, hidden_d, output_d),
    # lane-aligned so each feature grid has 2 tiles (exercises the pipeline).
    B, input_d, hidden_d, output_d = 8, 32, 256, 256

    key = jax.random.PRNGKey(0)
    kx, kw1, kb1, kg1, kbe1, kw2, kb2 = jax.random.split(key, 7)

    x = jax.random.normal(kx, (B, input_d), jnp.float32)

    # PyTorch-Linear-style uniform init; weights stored as (in, out) = weight.T.
    lim1 = 1.0 / (input_d ** 0.5)
    w1 = jax.random.uniform(kw1, (input_d, hidden_d), jnp.float32, -lim1, lim1)
    b1 = jax.random.uniform(kb1, (1, hidden_d), jnp.float32, -lim1, lim1)
    # Non-trivial BN affine params to exercise the affine path.
    g1 = 1.0 + 0.1 * jax.random.normal(kg1, (1, hidden_d), jnp.float32)
    be1 = 0.1 * jax.random.normal(kbe1, (1, hidden_d), jnp.float32)

    lim2 = 1.0 / (hidden_d ** 0.5)
    w2 = jax.random.uniform(kw2, (hidden_d, output_d), jnp.float32, -lim2, lim2)
    b2 = jax.random.uniform(kb2, (1, output_d), jnp.float32, -lim2, lim2)

    out = jax.block_until_ready(projection_layer_forward(x, w1, g1, be1, w2))
    assert out.shape == (B, output_d)
    assert out.dtype == jnp.float32

    # Exact-numerics check (kernel numerics mirrored in the reference).
    ref_same = _reference_bf16_mirror(x, w1, g1, be1, w2)
    assert jnp.allclose(out, ref_same, atol=5e-3, rtol=5e-3), \
        "mismatch vs bf16-mirror reference"

    # Semantic sanity check vs pure-f32 PyTorch math WITH biases (biases cancel
    # in train-mode BN; outputs are unit-variance after the final BN, so an
    # absolute bound is meaningful).
    ref_f32 = _reference_f32(x, w1, b1, g1, be1, w2, b2)
    max_err = float(jnp.max(jnp.abs(out - ref_f32)))
    assert max_err < 0.1, f"semantic drift vs f32 reference: {max_err}"

    print("KERNEL_OK")
</pallas_src>

<mosaic_0001>
module attributes {stable_mosaic.version = 11 : i64} {
  func.func @_layer1_kernel(%arg0: i32, %arg1: memref<8x32xbf16, #tpu.memory_space<vmem>>, %arg2: memref<32x128xbf16, #tpu.memory_space<vmem>>, %arg3: memref<1x128xf32, #tpu.memory_space<vmem>>, %arg4: memref<1x128xf32, #tpu.memory_space<vmem>>, %arg5: memref<8x128xbf16, #tpu.memory_space<vmem>>) attributes {dimension_semantics = [#tpu.dimension_semantics<parallel>], iteration_bounds = array<i64: 2>, scalar_prefetch = 0 : i64, scratch_operands = 0 : i64, tpu.core_type = #tpu.core_type<tc>, window_params = [{pipeline_mode = #tpu.pipeline_mode<synchronous>, transform_indices = @transform_0, window_bounds = array<i64: 8, 32>}, {transform_indices = @transform_1, window_bounds = array<i64: 32, 128>}, {transform_indices = @transform_2, window_bounds = array<i64: 1, 128>}, {transform_indices = @transform_3, window_bounds = array<i64: 1, 128>}, {transform_indices = @transform_4, window_bounds = array<i64: 8, 128>}]} {
    %c0 = arith.constant 0 : index
    %c0_0 = arith.constant 0 : index
    %0 = vector.load %arg1[%c0, %c0_0] : memref<8x32xbf16, #tpu.memory_space<vmem>>, vector<8x32xbf16>
    %c0_1 = arith.constant 0 : index
    %c0_2 = arith.constant 0 : index
    %1 = vector.load %arg2[%c0_1, %c0_2] : memref<32x128xbf16, #tpu.memory_space<vmem>>, vector<32x128xbf16>
    %cst = arith.constant dense<0.000000e+00> : vector<8x128xf32>
    %2 = tpu.matmul %0, %1, %cst {dimension_numbers = #tpu.dot_dimension_numbers<[1], [0], [0], [1], [0, 0, 1, 1], [], []>} : vector<8x32xbf16>, vector<32x128xbf16>, vector<8x128xf32> -> vector<8x128xf32>
    %cst_3 = arith.constant dense<0.000000e+00> : vector<128xf32>
    %3 = vector.multi_reduction <add>, %2, %cst_3 [0] : vector<8x128xf32> to vector<128xf32>
    %4 = vector.shape_cast %3 : vector<128xf32> to vector<1x128xf32>
    %cst_4 = arith.constant 8.000000e+00 : f32
    %5 = vector.broadcast %cst_4 : f32 to vector<1x128xf32>
    %6 = arith.divf %4, %5 : vector<1x128xf32>
    %7 = vector.broadcast %6 : vector<1x128xf32> to vector<8x128xf32>
    %8 = arith.subf %2, %7 : vector<8x128xf32>
    %9 = arith.mulf %8, %8 : vector<8x128xf32>
    %cst_5 = arith.constant dense<0.000000e+00> : vector<128xf32>
    %10 = vector.multi_reduction <add>, %9, %cst_5 [0] : vector<8x128xf32> to vector<128xf32>
    %11 = vector.shape_cast %10 : vector<128xf32> to vector<1x128xf32>
    %cst_6 = arith.constant 8.000000e+00 : f32
    %12 = vector.broadcast %cst_6 : f32 to vector<1x128xf32>
    %13 = arith.divf %11, %12 : vector<1x128xf32>
    %c0_7 = arith.constant 0 : index
    %c0_8 = arith.constant 0 : index
    %14 = vector.load %arg3[%c0_7, %c0_8] : memref<1x128xf32, #tpu.memory_space<vmem>>, vector<1x128xf32>
    %cst_9 = arith.constant 9.99999974E-6 : f32
    %15 = vector.broadcast %cst_9 : f32 to vector<1x128xf32>
    %16 = arith.addf %13, %15 : vector<1x128xf32>
    %17 = math.rsqrt %16 : vector<1x128xf32>
    %18 = arith.mulf %14, %17 : vector<1x128xf32>
    %19 = vector.broadcast %18 : vector<1x128xf32> to vector<8x128xf32>
    %20 = arith.mulf %8, %19 : vector<8x128xf32>
    %c0_10 = arith.constant 0 : index
    %c0_11 = arith.constant 0 : index
    %21 = vector.load %arg4[%c0_10, %c0_11] : memref<1x128xf32, #tpu.memory_space<vmem>>, vector<1x128xf32>
    %22 = vector.broadcast %21 : vector<1x128xf32> to vector<8x128xf32>
    %23 = arith.addf %20, %22 : vector<8x128xf32>
    %cst_12 = arith.constant 0.000000e+00 : f32
    %24 = vector.broadcast %cst_12 : f32 to vector<8x128xf32>
    %25 = arith.maximumf %23, %24 : vector<8x128xf32>
    %26 = arith.truncf %25 : vector<8x128xf32> to vector<8x128xbf16>
    %c0_13 = arith.constant 0 : index
    %c0_14 = arith.constant 0 : index
    %27 = vector.load %arg5[%c0_13, %c0_14] : memref<8x128xbf16, #tpu.memory_space<vmem>>, vector<8x128xbf16>
    tpu.vector_store %arg5[%c0_13, %c0_14], %26 {strides = array<i32>} : memref<8x128xbf16, #tpu.memory_space<vmem>>, vector<8x128xbf16>,
    return
  }
  func.func @transform_0(%arg0: i32) -> (i32, i32) {
    %c0_i32 = arith.constant 0 : i32
    %c0_i32_0 = arith.constant 0 : i32
    %c0_i32_1 = arith.constant 0 : i32
    return %c0_i32, %c0_i32_0 : i32, i32
  }
  func.func @transform_1(%arg0: i32) -> (i32, i32) {
    %c0_i32 = arith.constant 0 : i32
    %c0_i32_0 = arith.constant 0 : i32
    return %c0_i32, %arg0 : i32, i32
  }
  func.func @transform_2(%arg0: i32) -> (i32, i32) {
    %c0_i32 = arith.constant 0 : i32
    %c0_i32_0 = arith.constant 0 : i32
    return %c0_i32, %arg0 : i32, i32
  }
  func.func @transform_3(%arg0: i32) -> (i32, i32) {
    %c0_i32 = arith.constant 0 : i32
    %c0_i32_0 = arith.constant 0 : i32
    return %c0_i32, %arg0 : i32, i32
  }
  func.func @transform_4(%arg0: i32) -> (i32, i32) {
    %c0_i32 = arith.constant 0 : i32
    %c0_i32_0 = arith.constant 0 : i32
    return %c0_i32, %arg0 : i32, i32
  }
}

</mosaic_0001>

<llo_original>
// kernel: tpu_custom_call.1
$region0: #{tpu_custom_call.1}
  #allocation0 [shape = 'u32[]', space=smem, size = 0x4, offset = 0x4, fixed_abs, tag = 'smem constant byte address 0x4 - core index']
  #allocation1 [shape = 'u32[144,128]{1,0:T(1,128)}', space=vmem, size = 0x12000, scoped, tag = 'internal scratch']
  %s0 = inlined_call_operand.hbm [shape: bf16[8,32], index: 0, kind: input, shape index: {}]
  %s1 = inlined_call_operand.hbm [shape: bf16[32,256], index: 1, kind: input, shape index: {}]
  %s2 = inlined_call_operand.vmem [shape: f32[1,256], index: 2, kind: input, shape index: {}]
  %s3 = inlined_call_operand.vmem [shape: f32[1,256], index: 3, kind: input, shape index: {}]
  %s4 = inlined_call_operand.hbm [shape: bf16[8,256], index: 4, kind: output, shape index: {}]
  %s5 = sld [smem:[#allocation0]]
  $region57: #{tpu_custom_call.1} parent=0
    _
  %s7 = ssub.s32 1, %s5
  %s8 = scalar_select 0, %s7, %s5
  $region1: #{tpu_custom_call.1} parent=0
    #allocation2 [shape = 'u8[2048]{0}', space=vmem, size = 0x800, scoped, tag = 'input window, operand 0, single buffered']
    #allocation3 [shape = 's32[2]{0}', space=sflag, size = 0x8, scoped, tag = 'scoped memory for tpu_custom_call.1']
    #allocation4 [shape = 's32[2]{0}', space=sflag, size = 0x8, scoped, tag = 'scoped memory for tpu_custom_call.1']
    #allocation5 [shape = 'u8[16384]{0}', space=vmem, size = 0x4000, scoped, tag = 'input window, operand 1']
    #allocation6 [shape = 's32[2]{0}', space=sflag, size = 0x8, scoped, tag = 'scoped memory for tpu_custom_call.1']
    #allocation7 [shape = 'u8[4096]{0}', space=vmem, size = 0x1000, scoped, tag = 'output window, operand 0']
    %9 = vsyncpa [#allocation3], 0
    %10 = vsyncpa [#allocation6], 0
    %s11 = scalar_lea.sflag [#allocation6], 1
    %12 = vsyncpa %s11, 0
    %13 = vsyncpa [#allocation4], 0
    %s14 = scalar_lea.sflag [#allocation4], 1
    %15 = vsyncpa %s14, 0
    loop: start=0, step=1, limit=4
    $region2: #{tpu_custom_call.1} parent=1 // loop_pre_header
      _
    $region3: #{tpu_custom_call.1} parent=1 // loop_header
      %s17 = sphi 0, %s21
      %p18 = scmp.ge.s32.totalorder %s17, 4
      %s25 = sphi 0, %s25
      %s27 = sphi 0, %s25
      %s28 = sphi 0, %s27
      %s42 = sphi 0, %s28
      %s48 = sphi 0, %s50
      %s51 = sphi 0, %s48
      %s52 = sphi 0, %s51
      %s68 = sphi 0, %s52
      %s74 = sphi 0, %s76
      %s77 = sphi 0, %s74
      %s78 = sphi 0, %s77
      %s94 = sphi 0, %s78
      %s100 = sphi 0, %s102
      %s103 = sphi 0, %s100
      %s104 = sphi 0, %s103
      %s120 = sphi 0, %s104
      %s126 = sphi 0, %s128
      %s129 = sphi 0, %s126
      %s130 = sphi 0, %s129
      %s146 = sphi 0, %s130
    $region4: #{tpu_custom_call.1} parent=1 // loop_header_branch
      %20 = sbr.rel (%p18) target = $region8
    $region5: #{tpu_custom_call.1} parent=1 // loop_body
      %s22 = ssub.s32 %s17, 1
      %s23 = ssub.s32 %s17, 2
      %s24 = sadd.s32 %s17, 1
      %s26 = sadd.s32 %s25, 1
      %p29 = scmp.eq.s32.totalorder %s17, 1
      %p30 = scmp.ne.s32.totalorder %s25, %s27
      %p31 = scmp.eq.s32.totalorder %s17, 0
      %p32 = por %p30, %p31
      %p33 = scmp.ne.s32.totalorder %s25, %s27
      %p34 = scmp.eq.s32.totalorder %s22, 1
      %p35 = por %p33, %p34
      %p36 = scmp.ne.s32.totalorder %s27, %s28
      %p37 = scmp.eq.s32.totalorder %s22, 0
      %p38 = por %p36, %p37
      %p39 = scmp.ne.s32.totalorder %s27, %s28
      %p40 = scmp.eq.s32.totalorder %s23, 1
      %p41 = por %p39, %p40
      %p43 = scmp.ne.s32.totalorder %s28, %s42
      %p44 = scmp.eq.s32.totalorder %s23, 0
      %p45 = por %p43, %p44
      %s46 = ssub.s32 %s17, %s24
      %p47 = scmp.eq.s32.totalorder %s46, 0
      %s49 = sadd.s32 %s48, 1
      %s50 = scalar_select %p47, %s48, %s49
      %p53 = pneg %p47
      %p54 = scmp.eq.s32.totalorder %s17, 1
      %p55 = por %p53, %p54
      %p56 = scmp.ne.s32.totalorder %s48, %s51
      %p57 = scmp.eq.s32.totalorder %s17, 0
      %p58 = por %p56, %p57
      %p59 = scmp.ne.s32.totalorder %s48, %s51
      %p60 = scmp.eq.s32.totalorder %s22, 1
      %p61 = por %p59, %p60
      %p62 = scmp.ne.s32.totalorder %s51, %s52
      %p63 = scmp.eq.s32.totalorder %s22, 0
      %p64 = por %p62, %p63
      %p65 = scmp.ne.s32.totalorder %s51, %s52
      %p66 = scmp.eq.s32.totalorder %s23, 1
      %p67 = por %p65, %p66
      %p69 = scmp.ne.s32.totalorder %s52, %s68
      %p70 = scmp.eq.s32.totalorder %s23, 0
      %p71 = por %p69, %p70
      %s72 = ssub.s32 %s17, %s24
      %p73 = scmp.eq.s32.totalorder %s72, 0
      %s75 = sadd.s32 %s74, 1
      %s76 = scalar_select %p73, %s74, %s75
      %p79 = pneg %p73
      %p80 = scmp.eq.s32.totalorder %s17, 1
      %p81 = por %p79, %p80
      %p82 = scmp.ne.s32.totalorder %s74, %s77
      %p83 = scmp.eq.s32.totalorder %s17, 0
      %p84 = por %p82, %p83
      %p85 = scmp.ne.s32.totalorder %s74, %s77
      %p86 = scmp.eq.s32.totalorder %s22, 1
      %p87 = por %p85, %p86
      %p88 = scmp.ne.s32.totalorder %s77, %s78
      %p89 = scmp.eq.s32.totalorder %s22, 0
      %p90 = por %p88, %p89
      %p91 = scmp.ne.s32.totalorder %s77, %s78
      %p92 = scmp.eq.s32.totalorder %s23, 1
      %p93 = por %p91, %p92
      %p95 = scmp.ne.s32.totalorder %s78, %s94
      %p96 = scmp.eq.s32.totalorder %s23, 0
      %p97 = por %p95, %p96
      %s98 = ssub.s32 %s17, %s24
      %p99 = scmp.eq.s32.totalorder %s98, 0
      %s101 = sadd.s32 %s100, 1
      %s102 = scalar_select %p99, %s100, %s101
      %p105 = pneg %p99
      %p106 = scmp.eq.s32.totalorder %s17, 1
      %p107 = por %p105, %p106
      %p108 = scmp.ne.s32.totalorder %s100, %s103
      %p109 = scmp.eq.s32.totalorder %s17, 0
      %p110 = por %p108, %p109
      %p111 = scmp.ne.s32.totalorder %s100, %s103
      %p112 = scmp.eq.s32.totalorder %s22, 1
      %p113 = por %p111, %p112
      %p114 = scmp.ne.s32.totalorder %s103, %s104
      %p115 = scmp.eq.s32.totalorder %s22, 0
      %p116 = por %p114, %p115
      %p117 = scmp.ne.s32.totalorder %s103, %s104
      %p118 = scmp.eq.s32.totalorder %s23, 1
      %p119 = por %p117, %p118
      %p121 = scmp.ne.s32.totalorder %s104, %s120
      %p122 = scmp.eq.s32.totalorder %s23, 0
      %p123 = por %p121, %p122
      %s124 = ssub.s32 %s17, %s24
      %p125 = scmp.eq.s32.totalorder %s124, 0
      %s127 = sadd.s32 %s126, 1
      %s128 = scalar_select %p125, %s126, %s127
      %p131 = pneg %p125
      %p132 = scmp.eq.s32.totalorder %s17, 1
      %p133 = por %p131, %p132
      %p134 = scmp.ne.s32.totalorder %s126, %s129
      %p135 = scmp.eq.s32.totalorder %s17, 0
      %p136 = por %p134, %p135
      %p137 = scmp.ne.s32.totalorder %s126, %s129
      %p138 = scmp.eq.s32.totalorder %s22, 1
      %p139 = por %p137, %p138
      %p140 = scmp.ne.s32.totalorder %s129, %s130
      %p141 = scmp.eq.s32.totalorder %s22, 0
      %p142 = por %p140, %p141
      %p143 = scmp.ne.s32.totalorder %s129, %s130
      %p144 = scmp.eq.s32.totalorder %s23, 1
      %p145 = por %p143, %p144
      %p147 = scmp.ne.s32.totalorder %s130, %s146
      %p148 = scmp.eq.s32.totalorder %s23, 0
      %p149 = por %p147, %p148
      %p150 = scmp.le.s32.totalorder 1, %s17
      %p151 = scmp.lt.s32.totalorder %s17, 3
      %p152 = pnand %p150, %p151
      %p153 = pneg %p152
      // Predicated region
      $region9: #{tpu_custom_call.1} parent=5 // pred_check
        _
      $region10: #{tpu_custom_call.1} parent=5 // pred_check_branch
        %155 = sbr.rel (%p152) target = $region12
      $region11: #{tpu_custom_call.1} parent=5 // pred_region
        %s156 = ssub.s32 %s17, 1
        // Predicated region
        $region13: #{tpu_custom_call.1} parent=11 // pred_check
          %p157 = pneg %p38
        $region14: #{tpu_custom_call.1} parent=11 // pred_check_branch
          %159 = sbr.rel (%p157) target = $region16
        $region15: #{tpu_custom_call.1} parent=11 // pred_region
          %s161 = ssub.s32 64, 64
          %162 = vsyncadd [#allocation3], %s161
          %s164 = sshll.u32 [#allocation2], 4
          %s165 = int_to_ptr.vmem [resolvable:$true] %s164
          %167 = dma.hbm_to_vmem [thread:$0]  %s0, 64, %s165, [#allocation3]
        $region16: #{tpu_custom_call.1} parent=11 // pred_fallthru
          _
      $region12: #{tpu_custom_call.1} parent=5 // pred_fallthru
        _
      %p168 = scmp.lt.s32.totalorder %s17, 2
      // Predicated region
      $region17: #{tpu_custom_call.1} parent=5 // pred_check
        %p169 = pneg %p168
      $region18: #{tpu_custom_call.1} parent=5 // pred_check_branch
        %171 = sbr.rel (%p169) target = $region20
      $region19: #{tpu_custom_call.1} parent=5 // pred_region
        // Predicated region
        $region21: #{tpu_custom_call.1} parent=19 // pred_check
          %p172 = pneg %p58
        $region22: #{tpu_custom_call.1} parent=19 // pred_check_branch
          %174 = sbr.rel (%p172) target = $region24
        $region23: #{tpu_custom_call.1} parent=19 // pred_region
          %s175 = sand.u32 %s48, 1
          %s176 = scalar_lea.sflag [#allocation6], %s175
          %s177 = sand.u32 %s48, 1
          %s178 = smul.addr %s177, 16
          %s179 = scalar_lea.vmem [#allocation5], %s178
          %s181 = ssub.s32 256, 256
          %182 = vsyncadd %s176, %s181
          %s183 = smul.addr %s17, 64
          %s184 = scalar_lea.hbm %s1, %s183
          %s185 = sshll.u32 %s179, 4
          %s186 = int_to_ptr.vmem [resolvable:$true] %s185
          %191 = dma.hbm_to_vmem [thread:$0]  %s184, 256, %s186, %s176, 128, 64, 4
        $region24: #{tpu_custom_call.1} parent=19 // pred_fallthru
          _
        // Predicated region
        $region25: #{tpu_custom_call.1} parent=19 // pred_check
          %p192 = pneg %p84
        $region26: #{tpu_custom_call.1} parent=19 // pred_check_branch
          %194 = sbr.rel (%p192) target = $region28
        $region27: #{tpu_custom_call.1} parent=19 // pred_region
          %p195 = scmp.lt.s32.totalorder %s17, 1
          %s196 = scalar_select %p195, %s17, 1
          %s197 = scalar_lea.vmem %s2, %s196
        $region28: #{tpu_custom_call.1} parent=19 // pred_fallthru
          _
        // Predicated region
        $region29: #{tpu_custom_call.1} parent=19 // pred_check
          %p198 = pneg %p110
        $region30: #{tpu_custom_call.1} parent=19 // pred_check_branch
          %200 = sbr.rel (%p198) target = $region32
        $region31: #{tpu_custom_call.1} parent=19 // pred_region
          %p201 = scmp.lt.s32.totalorder %s17, 1
          %s202 = scalar_select %p201, %s17, 1
          %s203 = scalar_lea.vmem %s3, %s202
        $region32: #{tpu_custom_call.1} parent=19 // pred_fallthru
          _
      $region20: #{tpu_custom_call.1} parent=5 // pred_fallthru
        _
      %p204 = scmp.le.s32.totalorder 1, %s17
      %p205 = scmp.lt.s32.totalorder %s17, 3
      %p206 = pnand %p204, %p205
      %p207 = pneg %p206
      // Predicated region
      $region33: #{tpu_custom_call.1} parent=5 // pred_check
        _
      $region34: #{tpu_custom_call.1} parent=5 // pred_check_branch
        %209 = sbr.rel (%p206) target = $region36
      $region35: #{tpu_custom_call.1} parent=5 // pred_region
        %s210 = ssub.s32 %s17, 1
        // Predicated region
        $region37: #{tpu_custom_call.1} parent=35 // pred_check
          %p211 = pneg %p38
        $region38: #{tpu_custom_call.1} parent=35 // pred_check_branch
          %213 = sbr.rel (%p211) target = $region40
        $region39: #{tpu_custom_call.1} parent=35 // pred_region
          %214 = dma.done [#allocation3], 64
        $region40: #{tpu_custom_call.1} parent=35 // pred_fallthru
          _
        %s215 = sand.u32 %s51, 1
        %s216 = scalar_lea.sflag [#allocation6], %s215
        %s217 = sand.u32 %s51, 1
        %s218 = smul.addr %s217, 16
        %s219 = scalar_lea.vmem [#allocation5], %s218
        // Predicated region
        $region41: #{tpu_custom_call.1} parent=35 // pred_check
          %p220 = pneg %p64
        $region42: #{tpu_custom_call.1} parent=35 // pred_check_branch
          %222 = sbr.rel (%p220) target = $region44
        $region43: #{tpu_custom_call.1} parent=35 // pred_region
          %223 = dma.done %s216, 256
        $region44: #{tpu_custom_call.1} parent=35 // pred_fallthru
          _
        %p224 = pneg %p38
        %p225 = pneg %p35
        %s226 = sand.u32 %s51, 1
        %s227 = scalar_lea.sflag [#allocation6], %s226
        %s228 = sand.u32 %s51, 1
        %s229 = smul.addr %s228, 16
        %s230 = scalar_lea.vmem [#allocation5], %s229
        %p231 = pneg %p64
        %p232 = pneg %p61
        %p233 = scmp.lt.s32.totalorder %s22, 1
        %s234 = scalar_select %p233, %s22, 1
        %s235 = scalar_lea.vmem %s2, %s234
        %p236 = pneg %p90
        %p237 = pneg %p87
        %p238 = scmp.lt.s32.totalorder %s22, 1
        %s239 = scalar_select %p238, %s22, 1
        %s240 = scalar_lea.vmem %s3, %s239
        %p241 = pneg %p116
        %p242 = pneg %p113
        %p243 = pneg %p142
        %p244 = pneg %p139
        %s245 = sand.u32 %s129, 1
        %s246 = scalar_lea.sflag [#allocation4], %s245
        %s247 = sand.u32 %s129, 1
        %s248 = smul.addr %s247, 4
        %s249 = scalar_lea.vmem [#allocation7], %s248
        %p250 = scmp.lt.s32.totalorder %s22, 1
        %s251 = scalar_select %p250, %s22, 1
        %s252 = scalar_lea.vmem %s2, %s251
        %p253 = scmp.lt.s32.totalorder %s22, 1
        %s254 = scalar_select %p253, %s22, 1
        %s255 = scalar_lea.vmem %s3, %s254
        %v257 = vld [vmem:[#allocation2] sm:$0xf]
        %v258 = vld [vmem:[%s219] sm:$0xf]
        %v259 = vld [vmem:[%s219 + $0x4] sm:$0xf]
        %v260 = vld [vmem:[%s219 + $0x8] sm:$0xf]
        %v261 = vld [vmem:[%s219 + $0xc] sm:$0xf]
        %v266 = vunpack.c.l.b16 %v258
        %v267 = vunpack.c.l.b16 %v259
        %v268 = vunpack.c.l.b16 %v260
        %v269 = vunpack.c.l.b16 %v261
        %v270 = vpack.c.b16 %v267, %v266
        %v271 = vpack.c.b16 %v269, %v268
        %vm274 = vcmask 261120
        %v276 = vsel %vm274, %v257, 0
        %278 = vmatprep.subr.bf16.mxu0 0
        %279 = vmatpush1.bf16.msra.mxu0 0
        %280 = vmatprep.subr.bf16.mxu0 0
        %281 = vmatpush1.bf16.msra.mxu0 0
        %282 = vmatprep.subr.bf16.mxu0 0
        %283 = vmatpush1.bf16.msra.mxu0 0
        %284 = vmatprep.subr.bf16.mxu0 0
        %285 = vmatpush1.bf16.msra.mxu0 0
        %286 = vmatprep.subr.bf16.mxu0 0
        %287 = vmatpush1.bf16.msra.mxu0 0
        %288 = vmatprep.subr.bf16.mxu0 0
        %289 = vmatpush1.bf16.msra.mxu0 0
        %290 = vmatprep.subr.bf16.mxu0 0
        %291 = vmatpush1.bf16.msra.mxu0 %v271
        %292 = vmatprep.subr.bf16.mxu0 0
        %293 = vmatpush1.bf16.msra.mxu0 %v270
        %294 = vmatprep.subr.bf16.mxu0 0
        %295 = vmatpush2.bf16.msra.mxu0 0
        %296 = vmatprep.subr.bf16.mxu0 0
        %297 = vmatpush2.bf16.msra.mxu0 0
        %298 = vmatprep.subr.bf16.mxu0 0
        %299 = vmatpush2.bf16.msra.mxu0 0
        %300 = vmatprep.subr.bf16.mxu0 0
        %301 = vmatpush2.bf16.msra.mxu0 0
        %302 = vmatprep.subr.bf16.mxu0 0
        %303 = vmatpush2.bf16.msra.mxu0 0
        %304 = vmatprep.subr.bf16.mxu0 0
        %305 = vmatpush2.bf16.msra.mxu0 0
        %306 = vmatprep.subr.bf16.mxu0 0
        %307 = vmatpush2.bf16.msra.mxu0 0
        %308 = vmatprep.subr.bf16.mxu0 0
        %309 = vmatpush2.bf16.msra.mxu0 0
        %310 = vmatprep.mubr.bf16.mxu0 0
        %311 = vmatmul.mubr.bf16.gmra.mxu0 %v276
        %v312 = vpop.f32.mrf.mxu0
        %v313 = vadd.f32 0.0, %v312
        %v314 = vpop.f32.mrf.mxu0
        %v315 = vpop.f32.mrf.mxu0
        %v316 = vpop.f32.mrf.mxu0
        %317 = vdwg.mxu0
        %v318 = vrot.slane %v313, 4
        %v319 = vadd.f32 %v313, %v318
        %v320 = vrot.slane %v319, 2
        %v321 = vadd.f32 %v319, %v320
        %v322 = vrot.slane %v321, 1
        %v323 = vadd.f32 %v321, %v322
        %v324 = vrcp.pop 8.0
        %v325 = vmul.f32 %v323, %v324
        %v326 = vsub.f32 %v313, %v325
        %v327 = vmul.f32 %v326, %v326
        %v328 = vrot.slane %v327, 4
        %v329 = vadd.f32 %v327, %v328
        %v330 = vrot.slane %v329, 2
        %v331 = vadd.f32 %v329, %v330
        %v332 = vrot.slane %v331, 1
        %v333 = vadd.f32 %v331, %v332
        %v334 = vmul.f32 %v333, %v324
        %v335 = vld [vmem:[%s252] sm:$0x1]
        %v336 = vadd.f32 %v334, 1e-05
        %v337 = vrsqrt.pop %v336
        %v338 = vmul.f32 %v335, %v337
        %v340 = vlaneseq
        %v341 = vshrl.u32 %v340, 7
        %v342 = vsub.s32 0, %v341
        %v343 = vrot.slane %v338, %v342
        %v345 = vmul.f32 %v326, %v343
        %v346 = vld [vmem:[%s255] sm:$0x1]
        %v348 = vlaneseq
        %v349 = vshrl.u32 %v348, 7
        %v350 = vsub.s32 0, %v349
        %v351 = vrot.slane %v346, %v350
        %v353 = vadd.f32 %v345, %v351
        %v354 = vmax.f32 %v353, 0.0
        %v355 = vpack.c.bf16 %v354, %v354
        %356 = vst [vmem:[%s249] sm:$0xf] %v355
        %s357 = sand.u32 %s129, 1
        %s358 = scalar_lea.sflag [#allocation4], %s357
        %s359 = sand.u32 %s129, 1
        %s360 = smul.addr %s359, 4
        %s361 = scalar_lea.vmem [#allocation7], %s360
        // Predicated region
        $region45: #{tpu_custom_call.1} parent=35 // pred_check
          %p362 = pneg %p139
        $region46: #{tpu_custom_call.1} parent=35 // pred_check_branch
          %364 = sbr.rel (%p362) target = $region48
        $region47: #{tpu_custom_call.1} parent=35 // pred_region
          %s366 = ssub.s32 64, 64
          %367 = vsyncadd %s358, %s366
          %s368 = smul.addr %s22, 64
          %s369 = scalar_lea.hbm %s4, %s368
          %s371 = sshll.u32 %s361, 4
          %s372 = int_to_ptr.vmem [resolvable:$true] %s371
          %374 = dma.vmem_to_hbm [thread:$0]  %s372, 64, %s369, %s358
        $region48: #{tpu_custom_call.1} parent=35 // pred_fallthru
          _
      $region36: #{tpu_custom_call.1} parent=5 // pred_fallthru
        _
      %p375 = scmp.le.s32.totalorder 2, %s17
      // Predicated region
      $region49: #{tpu_custom_call.1} parent=5 // pred_check
        %p376 = pneg %p375
      $region50: #{tpu_custom_call.1} parent=5 // pred_check_branch
        %378 = sbr.rel (%p376) target = $region52
      $region51: #{tpu_custom_call.1} parent=5 // pred_region
        %s379 = ssub.s32 %s17, 2
        // Predicated region
        $region53: #{tpu_custom_call.1} parent=51 // pred_check
          %p380 = pneg %p145
        $region54: #{tpu_custom_call.1} parent=51 // pred_check_branch
          %382 = sbr.rel (%p380) target = $region56
        $region55: #{tpu_custom_call.1} parent=51 // pred_region
          %s383 = sand.u32 %s130, 1
          %s384 = scalar_lea.sflag [#allocation4], %s383
          %s385 = sand.u32 %s130, 1
          %s386 = smul.addr %s385, 4
          %s387 = scalar_lea.vmem [#allocation7], %s386
          %388 = dma.done %s384, 64
        $region56: #{tpu_custom_call.1} parent=51 // pred_fallthru
          _
      $region52: #{tpu_custom_call.1} parent=5 // pred_fallthru
        _
    $region6: #{tpu_custom_call.1} parent=1 // loop_footer
      %s21 = sadd.s32 1, %s17
    $region7: #{tpu_custom_call.1} parent=1 // loop_footer_branch
      %16 = sbr.rel target = $region3
    $region8: #{tpu_custom_call.1} parent=1 // loop_exit
      _
    %389 = vsyncpa [#allocation3], 1
    %s390 = scalar_lea.sflag [#allocation3], 1
    %391 = vsyncpa %s390, 1
    %392 = vsyncpa [#allocation6], 1
    %s393 = scalar_lea.sflag [#allocation6], 1
    %394 = vsyncpa %s393, 1
    %395 = vsyncpa [#allocation4], 1
    %s396 = scalar_lea.sflag [#allocation4], 1
    %397 = vsyncpa %s396, 1

</llo_original>
